<compile_context>
chip_gen: v5e
topology: v5e:2x2
jax: 0.10.0
libtpu: 0.0.40
codegen_flags: <defaults>
</compile_context>

<pallas_src>
import functools

import jax
import jax.numpy as jnp
from jax import lax
from jax.experimental import pallas as pl
from jax.experimental.pallas import tpu as pltpu


def _round_up(x, m):
    return ((x + m - 1) // m) * m


def _focal_factor(t, gamma):
    """(1 - p_t)**gamma, specialized at trace time on the static gamma."""
    g = float(gamma)
    if g.is_integer() and 0 <= int(g) <= 8:
        gi = int(g)
        if gi == 0:
            return jnp.ones_like(t)
        r = t
        for _ in range(gi - 1):
            r = r * t
        return r
    # Non-integer gamma: clamp so a p_t that rounds slightly above 1 cannot
    # produce NaN; pow lowers to log+exp on the EUP.
    return jnp.power(jnp.maximum(t, 0.0), jnp.float32(g))


def _focal_loss_kernel(preds_ref, labels_ref, alpha_ref, partial_ref,
                       *, gamma, n_valid_rows, tm, mask_rows):
    x = preds_ref[...].astype(jnp.float32)                  # (tm, C)
    labels = labels_ref[...]                                 # (tm, 1) int32
    col = lax.broadcasted_iota(jnp.int32, x.shape, 1)        # (tm, C)
    onehot = col == labels                                   # (tm, C)

    # Numerically stable log-sum-exp over the class axis.
    row_max = jnp.max(x, axis=-1, keepdims=True)             # (tm, 1)
    lse = jnp.log(jnp.sum(jnp.exp(x - row_max),
                          axis=-1, keepdims=True)) + row_max

    # Gather the label logit / alpha via the one-hot mask; never materialize
    # the full log-softmax tile.
    x_t = jnp.sum(jnp.where(onehot, x, 0.0), axis=-1, keepdims=True)
    logp_t = x_t - lse                                        # (tm, 1)
    p_t = jnp.exp(logp_t)
    alpha_t = jnp.sum(jnp.where(onehot, alpha_ref[...], 0.0),
                      axis=-1, keepdims=True)                 # (tm, 1)

    loss = -alpha_t * _focal_factor(1.0 - p_t, gamma) * logp_t

    # Mask the (possibly partial) last block — compiled in only when needed.
    if mask_rows:
        i = pl.program_id(0)
        row_idx = lax.broadcasted_iota(jnp.int32, (tm, 1), 0) + i * tm
        loss = jnp.where(row_idx < n_valid_rows, loss, 0.0)

    # Per-block partial sum; the cross-block reduction happens outside.
    partial_ref[0, 0] = jnp.sum(loss)


def focal_loss_pallas(preds, labels, alpha_vec, gamma=2.0, reduction='mean',
                      tm=None):
    """preds: [B, N, C] or [B, C]; labels: [B, N] or [B] integer classes."""
    num_classes = preds.shape[-1]
    preds2d = preds.reshape(-1, num_classes)
    labels2d = labels.reshape(-1, 1).astype(jnp.int32)
    m = preds2d.shape[0]

    # VMEM blocks are (8,128)-tiled, so the (tm, C) preds block really costs
    # tm * round_up(C,128) * 4 bytes and the (tm, 1) labels block tm * 512
    # bytes.  Pick the largest tm (multiple of 8) whose double-buffered
    # working set stays under ~8 MiB — big enough to amortize per-step
    # pipeline overhead, small enough for any current TPU's scoped VMEM.
    lane_c = _round_up(num_classes, 128)
    vmem_budget = 8 * 1024 * 1024
    tm_cap = max(8, vmem_budget // (2 * 4 * (lane_c + 128)))
    if tm is None:
        tm = min(4096, tm_cap)
    tm = max(8, min(int(tm), _round_up(m, 8)))
    tm = _round_up(tm, 8)
    num_blocks = (m + tm - 1) // tm
    mask_rows = (m % tm) != 0

    alpha2d = jnp.asarray(alpha_vec, jnp.float32).reshape(1, num_classes)

    kernel = functools.partial(
        _focal_loss_kernel, gamma=gamma, n_valid_rows=m, tm=tm,
        mask_rows=mask_rows)

    partials = pl.pallas_call(
        kernel,
        out_shape=jax.ShapeDtypeStruct((num_blocks, 1), jnp.float32),
        grid_spec=pltpu.PrefetchScalarGridSpec(
            num_scalar_prefetch=0,
            grid=(num_blocks,),
            in_specs=[
                pl.BlockSpec((tm, num_classes), lambda i: (i, 0)),
                pl.BlockSpec((tm, 1), lambda i: (i, 0)),
                pl.BlockSpec((1, num_classes), lambda i: (0, 0)),
            ],
            out_specs=pl.BlockSpec((1, 1), lambda i: (i, 0),
                                   memory_space=pltpu.MemorySpace.SMEM),
        ),
        compiler_params=pltpu.CompilerParams(
            dimension_semantics=("parallel",)),
    )(preds2d, labels2d, alpha2d)

    total = jnp.sum(partials)
    if reduction == 'sum':
        return total
    # default: 'mean' over the M per-row losses (matches the PyTorch module)
    return total / jnp.float32(m)


def focal_loss_ref(preds, labels, alpha_vec, gamma=2.0):
    """Pure-JAX reference mirroring the PyTorch forward (reduction='mean')."""
    num_classes = preds.shape[-1]
    p2 = preds.reshape(-1, num_classes).astype(jnp.float32)
    l1 = labels.reshape(-1).astype(jnp.int32)
    logsoft = jax.nn.log_softmax(p2, axis=1)
    logp_t = jnp.take_along_axis(logsoft, l1[:, None], axis=1)[:, 0]
    p_t = jnp.exp(logp_t)
    alpha_t = alpha_vec[l1]
    loss = -alpha_t * jnp.power(1.0 - p_t, gamma) * logp_t
    return jnp.mean(loss)


def _make_alpha(class_num, alpha_scalar):
    # Matches the module's __init__: alpha[0] = alpha, alpha[1:] = 1 - alpha.
    return jnp.concatenate([
        jnp.array([alpha_scalar], jnp.float32),
        jnp.full((class_num - 1,), 1.0 - alpha_scalar, jnp.float32),
    ])


if __name__ == "__main__":
    alpha_scalar = 0.25
    gamma = 2.0

    # Case 1: module defaults — class_num=3, preds [B, N, C], labels [B, N].
    class_num = 3
    alpha_vec = _make_alpha(class_num, alpha_scalar)
    key = jax.random.PRNGKey(0)
    kp, kl = jax.random.split(key)
    B, N, C = 2, 8, class_num
    preds = jax.random.normal(kp, (B, N, C), jnp.float32)
    labels = jax.random.randint(kl, (B, N), 0, C, jnp.int32)

    loss = jax.block_until_ready(
        focal_loss_pallas(preds, labels, alpha_vec, gamma=gamma))
    ref = focal_loss_ref(preds, labels, alpha_vec, gamma=gamma)
    assert jnp.allclose(loss, ref, rtol=1e-5, atol=1e-6), (loss, ref)

    # Case 2: multi-block grid with an unaligned (partial) last block,
    # exercising the row-mask path and the cross-block partial-sum reduce.
    C2 = 5
    alpha_vec2 = _make_alpha(C2, alpha_scalar)
    kp2, kl2 = jax.random.split(jax.random.PRNGKey(0))
    M2 = 70
    preds2 = jax.random.normal(kp2, (M2, C2), jnp.float32)
    labels2 = jax.random.randint(kl2, (M2,), 0, C2, jnp.int32)
    loss2 = jax.block_until_ready(
        focal_loss_pallas(preds2, labels2, alpha_vec2, gamma=gamma, tm=16))
    ref2 = focal_loss_ref(preds2, labels2, alpha_vec2, gamma=gamma)
    assert jnp.allclose(loss2, ref2, rtol=1e-5, atol=1e-6), (loss2, ref2)

    print("KERNEL_OK")
</pallas_src>

<mosaic_0001>
module attributes {stable_mosaic.version = 11 : i64} {
  func.func @_focal_loss_kernel(%arg0: i32, %arg1: memref<16x3xf32, #tpu.memory_space<vmem>>, %arg2: memref<16x1xi32, #tpu.memory_space<vmem>>, %arg3: memref<1x3xf32, #tpu.memory_space<vmem>>, %arg4: memref<1x1xf32, #tpu.memory_space<smem>>) attributes {dimension_semantics = [#tpu.dimension_semantics<parallel>], iteration_bounds = array<i64: 1>, scalar_prefetch = 0 : i64, scratch_operands = 0 : i64, tpu.core_type = #tpu.core_type<tc>, window_params = [{transform_indices = @transform_0, window_bounds = array<i64: 16, 3>}, {transform_indices = @transform_1, window_bounds = array<i64: 16, 1>}, {pipeline_mode = #tpu.pipeline_mode<synchronous>, transform_indices = @transform_2, window_bounds = array<i64: 1, 3>}, {transform_indices = @transform_3, window_bounds = array<i64: 1, 1>}]} {
    %c0 = arith.constant 0 : index
    %c0_0 = arith.constant 0 : index
    %0 = vector.load %arg1[%c0, %c0_0] : memref<16x3xf32, #tpu.memory_space<vmem>>, vector<16x3xf32>
    %c0_1 = arith.constant 0 : index
    %c0_2 = arith.constant 0 : index
    %1 = vector.load %arg2[%c0_1, %c0_2] : memref<16x1xi32, #tpu.memory_space<vmem>>, vector<16x1xi32>
    %2 = tpu.iota {dimensions = array<i32: 1>} : vector<16x3xi32>
    %3 = vector.broadcast %1 : vector<16x1xi32> to vector<16x3xi32>
    %4 = arith.cmpi eq, %2, %3 : vector<16x3xi32>
    %cst = arith.constant dense<0xFF800000> : vector<16xf32>
    %5 = vector.multi_reduction <maximumf>, %0, %cst [1] : vector<16x3xf32> to vector<16xf32>
    %6 = vector.shape_cast %5 : vector<16xf32> to vector<16x1xf32>
    %7 = vector.broadcast %6 : vector<16x1xf32> to vector<16x3xf32>
    %8 = arith.subf %0, %7 : vector<16x3xf32>
    %9 = math.exp %8 : vector<16x3xf32>
    %cst_3 = arith.constant dense<0.000000e+00> : vector<16xf32>
    %10 = vector.multi_reduction <add>, %9, %cst_3 [1] : vector<16x3xf32> to vector<16xf32>
    %11 = vector.shape_cast %10 : vector<16xf32> to vector<16x1xf32>
    %12 = math.log %11 : vector<16x1xf32>
    %13 = arith.addf %12, %6 : vector<16x1xf32>
    %cst_4 = arith.constant 0.000000e+00 : f32
    %14 = vector.broadcast %cst_4 : f32 to vector<16x3xf32>
    %15 = arith.select %4, %0, %14 : vector<16x3xi1>, vector<16x3xf32>
    %cst_5 = arith.constant dense<0.000000e+00> : vector<16xf32>
    %16 = vector.multi_reduction <add>, %15, %cst_5 [1] : vector<16x3xf32> to vector<16xf32>
    %17 = vector.shape_cast %16 : vector<16xf32> to vector<16x1xf32>
    %18 = arith.subf %17, %13 : vector<16x1xf32>
    %19 = math.exp %18 : vector<16x1xf32>
    %c0_6 = arith.constant 0 : index
    %c0_7 = arith.constant 0 : index
    %20 = vector.load %arg3[%c0_6, %c0_7] : memref<1x3xf32, #tpu.memory_space<vmem>>, vector<1x3xf32>
    %cst_8 = arith.constant 0.000000e+00 : f32
    %21 = vector.shape_cast %20 : vector<1x3xf32> to vector<1x3xf32>
    %22 = vector.broadcast %21 : vector<1x3xf32> to vector<16x3xf32>
    %23 = vector.broadcast %cst_8 : f32 to vector<16x3xf32>
    %24 = arith.select %4, %22, %23 : vector<16x3xi1>, vector<16x3xf32>
    %cst_9 = arith.constant dense<0.000000e+00> : vector<16xf32>
    %25 = vector.multi_reduction <add>, %24, %cst_9 [1] : vector<16x3xf32> to vector<16xf32>
    %26 = vector.shape_cast %25 : vector<16xf32> to vector<16x1xf32>
    %cst_10 = arith.constant 0.000000e+00 : f32
    %27 = vector.broadcast %cst_10 : f32 to vector<16x1xf32>
    %28 = arith.subf %27, %26 : vector<16x1xf32>
    %cst_11 = arith.constant 1.000000e+00 : f32
    %29 = vector.broadcast %cst_11 : f32 to vector<16x1xf32>
    %30 = arith.subf %29, %19 : vector<16x1xf32>
    %31 = arith.mulf %30, %30 : vector<16x1xf32>
    %32 = arith.mulf %28, %31 : vector<16x1xf32>
    %33 = arith.mulf %32, %18 : vector<16x1xf32>
    %34 = vector.shape_cast %33 : vector<16x1xf32> to vector<1x16x1xf32>
    %cst_12 = arith.constant dense<0.000000e+00> : vector<1xf32>
    %35 = vector.multi_reduction <add>, %34, %cst_12 [1, 2] : vector<1x16x1xf32> to vector<1xf32>
    %36 = vector.shape_cast %35 : vector<1xf32> to vector<1x1x1xf32>
    %37 = vector.extract %36[0, 0, 0] : f32 from vector<1x1x1xf32>
    %c0_13 = arith.constant 0 : index
    %c0_14 = arith.constant 0 : index
    %38 = memref.load %arg4[%c0_13, %c0_14] : memref<1x1xf32, #tpu.memory_space<smem>>
    memref.store %37, %arg4[%c0_13, %c0_14] : memref<1x1xf32, #tpu.memory_space<smem>>
    return
  }
  func.func @transform_0(%arg0: i32) -> (i32, i32) {
    %c0_i32 = arith.constant 0 : i32
    %c0_i32_0 = arith.constant 0 : i32
    return %arg0, %c0_i32 : i32, i32
  }
  func.func @transform_1(%arg0: i32) -> (i32, i32) {
    %c0_i32 = arith.constant 0 : i32
    %c0_i32_0 = arith.constant 0 : i32
    return %arg0, %c0_i32 : i32, i32
  }
  func.func @transform_2(%arg0: i32) -> (i32, i32) {
    %c0_i32 = arith.constant 0 : i32
    %c0_i32_0 = arith.constant 0 : i32
    %c0_i32_1 = arith.constant 0 : i32
    return %c0_i32, %c0_i32_0 : i32, i32
  }
  func.func @transform_3(%arg0: i32) -> (i32, i32) {
    %c0_i32 = arith.constant 0 : i32
    %c0_i32_0 = arith.constant 0 : i32
    return %arg0, %c0_i32 : i32, i32
  }
}

</mosaic_0001>

<llo_original>
// kernel: tpu_custom_call.1
$region0: #{tpu_custom_call.1}
  #allocation0 [shape = 'u32[]', space=smem, size = 0x4, offset = 0x4, fixed_abs, tag = 'smem constant byte address 0x4 - core index']
  #allocation1 [shape = 'u32[72,128]{1,0:T(1,128)}', space=vmem, size = 0x9000, scoped, tag = 'internal scratch']
  %s0 = inlined_call_operand.vmem [shape: f32[16,3], index: 0, kind: input, shape index: {}]
  %s1 = inlined_call_operand.vmem [shape: s32[16,1], index: 1, kind: input, shape index: {}]
  %s2 = inlined_call_operand.vmem [shape: f32[1,3], index: 2, kind: input, shape index: {}]
  %s3 = inlined_call_operand.hbm [shape: f32[1,1], index: 3, kind: output, shape index: {}]
  %s4 = sld [smem:[#allocation0]]
  $region22: #{tpu_custom_call.1} parent=0
    _
  %s6 = ssub.s32 1, %s4
  %s7 = scalar_select 0, %s6, %s4
  $region1: #{tpu_custom_call.1} parent=0
    #allocation2 [shape = 'u8[512]{0}', space=smem, size = 0x200, scoped, tag = 'output window, operand 0, single buffered']
    #allocation3 [shape = 's32[1]{0}', space=sflag, size = 0x4, scoped, tag = 'scoped memory for tpu_custom_call.1']
    %8 = vsyncpa [#allocation3], 0
    // Predicated region
    $region2: #{tpu_custom_call.1} parent=1 // pred_check
      _
    $region3: #{tpu_custom_call.1} parent=1 // pred_check_branch
      %10 = sbr.rel (0) target = $region5
    $region4: #{tpu_custom_call.1} parent=1 // pred_region
      _
    $region5: #{tpu_custom_call.1} parent=1 // pred_fallthru
      _
    // Predicated region
    $region6: #{tpu_custom_call.1} parent=1 // pred_check
      _
    $region7: #{tpu_custom_call.1} parent=1 // pred_check_branch
      %12 = sbr.rel (0) target = $region9
    $region8: #{tpu_custom_call.1} parent=1 // pred_region
      _
    $region9: #{tpu_custom_call.1} parent=1 // pred_fallthru
      _
    // Predicated region
    $region10: #{tpu_custom_call.1} parent=1 // pred_check
      _
    $region11: #{tpu_custom_call.1} parent=1 // pred_check_branch
      %14 = sbr.rel (0) target = $region13
    $region12: #{tpu_custom_call.1} parent=1 // pred_region
      _
    $region13: #{tpu_custom_call.1} parent=1 // pred_fallthru
      _
    %v15 = vld [vmem:[%s0] sm:$0xff]
    %v16 = vld [vmem:[%s0 + $0x8] sm:$0xff]
    %v17 = vld [vmem:[%s1] sm:$0xff]
    %v18 = vld [vmem:[%s1 + $0x8] sm:$0xff]
    %v19 = vlaneseq
    %v20 = vand.u32 %v19, 127
    %21 = vset.pattern.permute.xlu0 0
    %22 = vperm.xlu0 %21, %v17
    %v23 = vpop.permute.xlu0 %22
    %24 = vset.pattern.permute.xlu0 0
    %25 = vperm.xlu0 %24, %v18
    %v26 = vpop.permute.xlu0 %25
    %vm27 = vcmp.eq.s32.totalorder %v20, %v23
    %vm28 = vcmp.eq.s32.totalorder %v20, %v26
    %vm29 = vcmask 23552
    %v30 = vsel %vm29, %v15, -inf
    %31 = vmax.xlane.f32.xlu0 %v30
    %v32 = vpop.xlane.xlu0 %31
    %v33 = vsel %vm29, %v16, -inf
    %34 = vmax.xlane.f32.xlu0 %v33
    %v35 = vpop.xlane.xlu0 %34
    %v36 = vsub.f32 %v15, %v32
    %v37 = vsub.f32 %v16, %v35
    %v38 = vmul.f32 %v36, 1.442695
    %v39 = vpow.pop %v38
    %v40 = vmul.f32 %v37, 1.442695
    %v41 = vpow.pop %v40
    %v42 = vsel %vm29, %v39, 0.0
    %43 = vadd.xlane.f32.xlu0 %v42
    %v44 = vpop.xlane.xlu0 %43
    %v45 = vsel %vm29, %v41, 0.0
    %46 = vadd.xlane.f32.xlu0 %v45
    %v47 = vpop.xlane.xlu0 %46
    %v48 = vlog2.pop %v44
    %v49 = vmul.f32 %v48, 0.6931472
    %v50 = vlog2.pop %v47
    %v51 = vmul.f32 %v50, 0.6931472
    %v52 = vadd.f32 %v49, %v32
    %v53 = vadd.f32 %v51, %v35
    %v54 = vsel %vm27, %v15, 0.0
    %v55 = vsel %vm28, %v16, 0.0
    %v56 = vsel %vm29, %v54, 0.0
    %57 = vadd.xlane.f32.xlu0 %v56
    %v58 = vpop.xlane.xlu0 %57
    %v59 = vsel %vm29, %v55, 0.0
    %60 = vadd.xlane.f32.xlu0 %v59
    %v61 = vpop.xlane.xlu0 %60
    %v62 = vsub.f32 %v58, %v52
    %v63 = vsub.f32 %v61, %v53
    %v64 = vmul.f32 %v62, 1.442695
    %v65 = vpow.pop %v64
    %v66 = vmul.f32 %v63, 1.442695
    %v67 = vpow.pop %v66
    %v68 = vld [vmem:[%s2] sm:$0x1]
    %v70 = vperm.slane %v68, 0
    %v72 = vsel %vm27, %v70, 0.0
    %v73 = vsel %vm28, %v70, 0.0
    %v74 = vsel %vm29, %v72, 0.0
    %75 = vadd.xlane.f32.xlu0 %v74
    %v76 = vpop.xlane.xlu0 %75
    %v77 = vsel %vm29, %v73, 0.0
    %78 = vadd.xlane.f32.xlu0 %v77
    %v79 = vpop.xlane.xlu0 %78
    %v80 = vsub.f32 0.0, %v76
    %v81 = vsub.f32 0.0, %v79
    %v82 = vsub.f32 1.0, %v65
    %v83 = vsub.f32 1.0, %v67
    %v84 = vmul.f32 %v82, %v82
    %v85 = vmul.f32 %v83, %v83
    %v86 = vmul.f32 %v80, %v84
    %v87 = vmul.f32 %v81, %v85
    %v88 = vmul.f32 %v86, %v62
    %v89 = vmul.f32 %v87, %v63
    %vm90 = vcmask 7168
    %v91 = vsel %vm90, %v88, 0.0
    %v92 = vsel %vm90, %v89, 0.0
    %v93 = vadd.f32 %v91, %v92
    %94 = vadd.xlane.f32.xlu0 %v93
    %v95 = vpop.xlane.xlu0 %94
    %v96 = vrot.slane %v95, 4
    %v97 = vadd.f32 %v95, %v96
    %v98 = vrot.slane %v97, 2
    %v99 = vadd.f32 %v97, %v98
    %v100 = vrot.slane %v99, 1
    %v101 = vadd.f32 %v99, %v100
    %s102 = vtos %v101
    %s103 = scalar_lea.smem [#allocation2], 0
    %104 = sst [smem:[%s103]] %s102
    // Predicated region
    $region14: #{tpu_custom_call.1} parent=1 // pred_check
      _
    $region15: #{tpu_custom_call.1} parent=1 // pred_check_branch
      %106 = sbr.rel (0) target = $region17
    $region16: #{tpu_custom_call.1} parent=1 // pred_region
      %108 = vsyncadd [#allocation3], 0
      %s110 = sshll.u32 %s3, 4
      %s111 = int_to_ptr.hbm [resolvable:$true] %s110
      %113 = dma.smem_to_hbm [#allocation2], 16, %s111, [#allocation3]
    $region17: #{tpu_custom_call.1} parent=1 // pred_fallthru
      _
    // Predicated region
    $region18: #{tpu_custom_call.1} parent=1 // pred_check
      _
    $region19: #{tpu_custom_call.1} parent=1 // pred_check_branch
      %115 = sbr.rel (0) target = $region21
    $region20: #{tpu_custom_call.1} parent=1 // pred_region
      %117 = dma.done [#allocation3], 16
    $region21: #{tpu_custom_call.1} parent=1 // pred_fallthru
      _
    %118 = sfence
    %119 = vsyncpa [#allocation3], 1

</llo_original>
